<compile_context>
chip_gen: v5e
topology: v5e:2x2
jax: 0.10.0
libtpu: 0.0.40
codegen_flags: <defaults>
</compile_context>

<pallas_src>
import jax
import jax.numpy as jnp
from jax.experimental import pallas as pl
from jax.experimental.pallas import tpu as pltpu

HIDDEN = 128
VOCAB = 15               # output classes
EMB_ROWS = VOCAB + 1     # nn.Embedding(vocab_size + 1, hidden) -> 16 rows
OUT_PAD = 16             # 15 classes padded to 16 lanes (== full array last dim)
NEG_BIG = -1e30          # bias for the padded logit lane (exp underflows to 0)


def _policy_kernel(tok_ref, h1_ref, w2_ref, b2_ref, w3_ref, b3_ref, out_ref):
    # tok_ref: (TM, 1) int32 token ids in [0, 15]
    # h1_ref : (16, H) folded table  relu(emb @ W1^T + b1)
    tok = tok_ref[...]
    tm = tok.shape[0]

    # Embedding + fc1 + relu as a one-hot matmul against the folded table.
    # NOTE: ids outside [0, 15] would map to an all-zero row (original module
    # would error on such ids, so they never occur in valid inputs).
    col = jax.lax.broadcasted_iota(jnp.int32, (tm, EMB_ROWS), 1)
    onehot = (tok == col).astype(h1_ref.dtype)                     # (TM, 16)
    h = jnp.dot(onehot, h1_ref[...],
                preferred_element_type=jnp.float32)                # (TM, H) f32

    # fc2 + relu (bias/relu kept in f32 -- v5e VPU has no bf16 path).
    h = jnp.dot(h.astype(w2_ref.dtype), w2_ref[...],
                preferred_element_type=jnp.float32) + b2_ref[...]
    h = jnp.maximum(h, 0.0)

    # fc3, padded to 16 output lanes; the padded lane carries a -1e30 bias.
    logits = jnp.dot(h.astype(w3_ref.dtype), w3_ref[...],
                     preferred_element_type=jnp.float32) + b3_ref[...]

    # log_softmax over the last dim; padded lane contributes exp(-huge) == 0.
    m = jnp.max(logits, axis=-1, keepdims=True)
    z = logits - m
    lse = jnp.log(jnp.sum(jnp.exp(z), axis=-1, keepdims=True))
    out_ref[...] = z - lse                                          # (TM, 16) f32


def prepare_params(params, matmul_dtype=jnp.bfloat16):
    """One-time parameter preprocessing (hoisted out of the per-call path)."""
    emb, w1, b1, w2, b2, w3, b3 = params
    # Fold embedding + fc1 + relu into a (16, H) per-token table (exact in f32;
    # bf16 only rounds the folded activations / matmul operands).
    h1_table = jnp.maximum(emb @ w1.T + b1, 0.0).astype(matmul_dtype)   # (16, H)
    w2t = w2.T.astype(matmul_dtype)                                     # (H, H)
    b2r = b2.reshape(1, HIDDEN).astype(jnp.float32)
    # fc3 padded 15 -> 16 output lanes; padded lane gets a -1e30 bias.
    w3t = jnp.pad(w3.T, ((0, 0), (0, OUT_PAD - VOCAB))).astype(matmul_dtype)
    b3r = jnp.pad(b3.reshape(1, VOCAB), ((0, 0), (0, OUT_PAD - VOCAB)),
                  constant_values=NEG_BIG).astype(jnp.float32)
    return h1_table, w2t, b2r, w3t, b3r


def _row_tile(n_rows, tm_max, min_steps=4):
    # Tile ~n_rows/min_steps (rounded up to the 8-sublane granule) so the grid
    # keeps >= min_steps "parallel" steps (both v7x TensorCores get work, good
    # load balance), capped at tm_max (overhead amortization / VMEM headroom).
    tgt = 8 * pl.cdiv(pl.cdiv(n_rows, min_steps), 8)
    return int(max(8, min(tm_max, tgt)))


def policy_forward(tokens, prepped, *, tm=4096):
    """tokens: (B, S) int32 in [0, 15]; prepped = prepare_params(params).
    Returns (B, S, VOCAB) float32 log-probs."""
    h1_table, w2t, b2r, w3t, b3r = prepped
    B, S = tokens.shape
    N = B * S
    tm_eff = _row_tile(N, tm)
    n_pad = pl.cdiv(N, tm_eff) * tm_eff

    # Padded rows use token id 0; their outputs are stripped below.
    tok_flat = jnp.pad(tokens.reshape(-1), (0, n_pad - N)).astype(jnp.int32)
    tok_flat = tok_flat.reshape(n_pad, 1)

    grid = (n_pad // tm_eff,)
    full = lambda i: (0, 0)  # grid-invariant blocks: Pallas skips re-DMA

    cost = pl.CostEstimate(
        flops=2 * n_pad * HIDDEN * (EMB_ROWS + HIDDEN + OUT_PAD),
        transcendentals=n_pad * (OUT_PAD + 1),
        bytes_accessed=(n_pad * 4                       # token ids
                        + n_pad * OUT_PAD * 4           # log-prob output
                        + (EMB_ROWS + HIDDEN + OUT_PAD) * HIDDEN * 4))

    out = pl.pallas_call(
        _policy_kernel,
        out_shape=jax.ShapeDtypeStruct((n_pad, OUT_PAD), jnp.float32),
        grid_spec=pltpu.PrefetchScalarGridSpec(
            num_scalar_prefetch=0,
            grid=grid,
            in_specs=[
                pl.BlockSpec((tm_eff, 1), lambda i: (i, 0)),       # token ids
                pl.BlockSpec((EMB_ROWS, HIDDEN), full),            # folded emb+fc1
                pl.BlockSpec((HIDDEN, HIDDEN), full),              # W2^T
                pl.BlockSpec((1, HIDDEN), full),                   # b2
                pl.BlockSpec((HIDDEN, OUT_PAD), full),             # W3^T (16 lanes)
                pl.BlockSpec((1, OUT_PAD), full),                  # b3 (16 lanes)
            ],
            out_specs=pl.BlockSpec((tm_eff, OUT_PAD), lambda i: (i, 0)),
        ),
        compiler_params=pltpu.CompilerParams(
            dimension_semantics=("parallel",)),
        cost_estimate=cost,
    )(tok_flat, h1_table, w2t, b2r, w3t, b3r)

    # Strip pad rows and the 16th (padded) class lane; 16-lane array keeps this
    # cheap and it fuses with the consumer under jit.
    return out[:N, :VOCAB].reshape(B, S, VOCAB)


def init_params(key):
    ks = jax.random.split(key, 7)
    scale_h = 1.0 / jnp.sqrt(HIDDEN)
    emb = jax.random.normal(ks[0], (EMB_ROWS, HIDDEN), jnp.float32)
    w1 = jax.random.uniform(ks[1], (HIDDEN, HIDDEN), jnp.float32, -scale_h, scale_h)
    b1 = jax.random.uniform(ks[2], (HIDDEN,), jnp.float32, -scale_h, scale_h)
    w2 = jax.random.uniform(ks[3], (HIDDEN, HIDDEN), jnp.float32, -scale_h, scale_h)
    b2 = jax.random.uniform(ks[4], (HIDDEN,), jnp.float32, -scale_h, scale_h)
    w3 = jax.random.uniform(ks[5], (VOCAB, HIDDEN), jnp.float32, -scale_h, scale_h)
    b3 = jax.random.uniform(ks[6], (VOCAB,), jnp.float32, -scale_h, scale_h)
    return emb, w1, b1, w2, b2, w3, b3


def reference_forward(tokens, params):
    emb, w1, b1, w2, b2, w3, b3 = params
    x = emb[tokens]                                   # embedding gather
    x = jnp.maximum(x @ w1.T + b1, 0.0)
    x = jnp.maximum(x @ w2.T + b2, 0.0)
    x = x @ w3.T + b3
    return jax.nn.log_softmax(x, axis=-1)


if __name__ == "__main__":
    key = jax.random.PRNGKey(0)
    pkey, tkey = jax.random.split(key)
    params = init_params(pkey)

    B, S = 2, 8
    tokens = jax.random.randint(tkey, (B, S), 0, EMB_ROWS, dtype=jnp.int32)
    ref = reference_forward(tokens, params)

    fwd = jax.jit(policy_forward)

    # Default bf16-operand path (MXU-native on v5e/v6e/v7x); f32 accumulate +
    # f32 bias/relu/softmax, so only operand/activation rounding differs.
    prepped_bf16 = jax.tree_util.tree_map(jax.block_until_ready,
                                          prepare_params(params))
    out_bf16 = jax.block_until_ready(fwd(tokens, prepped_bf16))
    assert out_bf16.shape == (B, S, VOCAB)
    assert jnp.allclose(out_bf16, ref, atol=5e-2, rtol=5e-2)

    # Exact f32 path.
    prepped_f32 = prepare_params(params, matmul_dtype=jnp.float32)
    out_f32 = jax.block_until_ready(fwd(tokens, prepped_f32))
    assert out_f32.shape == (B, S, VOCAB)
    assert jnp.allclose(out_f32, ref, atol=1e-4, rtol=1e-4)

    print("KERNEL_OK")
</pallas_src>

<mosaic_0001>
module attributes {stable_mosaic.version = 11 : i64} {
  func.func @_policy_kernel(%arg0: i32, %arg1: memref<8x1xi32, #tpu.memory_space<vmem>>, %arg2: memref<16x128xbf16, #tpu.memory_space<vmem>>, %arg3: memref<128x128xbf16, #tpu.memory_space<vmem>>, %arg4: memref<1x128xf32, #tpu.memory_space<vmem>>, %arg5: memref<128x16xbf16, #tpu.memory_space<vmem>>, %arg6: memref<1x16xf32, #tpu.memory_space<vmem>>, %arg7: memref<8x16xf32, #tpu.memory_space<vmem>>) attributes {dimension_semantics = [#tpu.dimension_semantics<parallel>], iteration_bounds = array<i64: 2>, scalar_prefetch = 0 : i64, scratch_operands = 0 : i64, tpu.core_type = #tpu.core_type<tc>, window_params = [{transform_indices = @transform_0, window_bounds = array<i64: 8, 1>}, {pipeline_mode = #tpu.pipeline_mode<synchronous>, transform_indices = @transform_1, window_bounds = array<i64: 16, 128>}, {pipeline_mode = #tpu.pipeline_mode<synchronous>, transform_indices = @transform_2, window_bounds = array<i64: 128, 128>}, {pipeline_mode = #tpu.pipeline_mode<synchronous>, transform_indices = @transform_3, window_bounds = array<i64: 1, 128>}, {pipeline_mode = #tpu.pipeline_mode<synchronous>, transform_indices = @transform_4, window_bounds = array<i64: 128, 16>}, {pipeline_mode = #tpu.pipeline_mode<synchronous>, transform_indices = @transform_5, window_bounds = array<i64: 1, 16>}, {transform_indices = @transform_6, window_bounds = array<i64: 8, 16>}]} {
    %c0 = arith.constant 0 : index
    %c0_0 = arith.constant 0 : index
    %0 = vector.load %arg1[%c0, %c0_0] : memref<8x1xi32, #tpu.memory_space<vmem>>, vector<8x1xi32>
    %1 = tpu.iota {dimensions = array<i32: 1>} : vector<8x16xi32>
    %2 = vector.broadcast %0 : vector<8x1xi32> to vector<8x16xi32>
    %3 = arith.cmpi eq, %2, %1 : vector<8x16xi32>
    %4 = arith.extui %3 : vector<8x16xi1> to vector<8x16xi32>
    %5 = arith.sitofp %4 : vector<8x16xi32> to vector<8x16xf32>
    %6 = arith.truncf %5 : vector<8x16xf32> to vector<8x16xbf16>
    %c0_1 = arith.constant 0 : index
    %c0_2 = arith.constant 0 : index
    %7 = vector.load %arg2[%c0_1, %c0_2] : memref<16x128xbf16, #tpu.memory_space<vmem>>, vector<16x128xbf16>
    %cst = arith.constant dense<0.000000e+00> : vector<8x128xf32>
    %8 = tpu.matmul %6, %7, %cst {dimension_numbers = #tpu.dot_dimension_numbers<[1], [0], [0], [1], [0, 0, 1, 1], [], []>} : vector<8x16xbf16>, vector<16x128xbf16>, vector<8x128xf32> -> vector<8x128xf32>
    %9 = arith.truncf %8 : vector<8x128xf32> to vector<8x128xbf16>
    %c0_3 = arith.constant 0 : index
    %c0_4 = arith.constant 0 : index
    %10 = vector.load %arg3[%c0_3, %c0_4] : memref<128x128xbf16, #tpu.memory_space<vmem>>, vector<128x128xbf16>
    %cst_5 = arith.constant dense<0.000000e+00> : vector<8x128xf32>
    %11 = tpu.matmul %9, %10, %cst_5 {dimension_numbers = #tpu.dot_dimension_numbers<[1], [0], [0], [1], [0, 0, 1, 1], [], []>} : vector<8x128xbf16>, vector<128x128xbf16>, vector<8x128xf32> -> vector<8x128xf32>
    %c0_6 = arith.constant 0 : index
    %c0_7 = arith.constant 0 : index
    %12 = vector.load %arg4[%c0_6, %c0_7] : memref<1x128xf32, #tpu.memory_space<vmem>>, vector<1x128xf32>
    %13 = vector.broadcast %12 : vector<1x128xf32> to vector<8x128xf32>
    %14 = arith.addf %11, %13 : vector<8x128xf32>
    %cst_8 = arith.constant 0.000000e+00 : f32
    %15 = vector.broadcast %cst_8 : f32 to vector<8x128xf32>
    %16 = arith.maximumf %14, %15 : vector<8x128xf32>
    %17 = arith.truncf %16 : vector<8x128xf32> to vector<8x128xbf16>
    %c0_9 = arith.constant 0 : index
    %c0_10 = arith.constant 0 : index
    %18 = vector.load %arg5[%c0_9, %c0_10] : memref<128x16xbf16, #tpu.memory_space<vmem>>, vector<128x16xbf16>
    %cst_11 = arith.constant dense<0.000000e+00> : vector<8x16xf32>
    %19 = tpu.matmul %17, %18, %cst_11 {dimension_numbers = #tpu.dot_dimension_numbers<[1], [0], [0], [1], [0, 0, 1, 1], [], []>} : vector<8x128xbf16>, vector<128x16xbf16>, vector<8x16xf32> -> vector<8x16xf32>
    %c0_12 = arith.constant 0 : index
    %c0_13 = arith.constant 0 : index
    %20 = vector.load %arg6[%c0_12, %c0_13] : memref<1x16xf32, #tpu.memory_space<vmem>>, vector<1x16xf32>
    %21 = vector.broadcast %20 : vector<1x16xf32> to vector<8x16xf32>
    %22 = arith.addf %19, %21 : vector<8x16xf32>
    %cst_14 = arith.constant dense<0xFF800000> : vector<8xf32>
    %23 = vector.multi_reduction <maximumf>, %22, %cst_14 [1] : vector<8x16xf32> to vector<8xf32>
    %24 = vector.shape_cast %23 : vector<8xf32> to vector<8x1xf32>
    %25 = vector.broadcast %24 : vector<8x1xf32> to vector<8x16xf32>
    %26 = arith.subf %22, %25 : vector<8x16xf32>
    %27 = math.exp %26 : vector<8x16xf32>
    %cst_15 = arith.constant dense<0.000000e+00> : vector<8xf32>
    %28 = vector.multi_reduction <add>, %27, %cst_15 [1] : vector<8x16xf32> to vector<8xf32>
    %29 = vector.shape_cast %28 : vector<8xf32> to vector<8x1xf32>
    %30 = math.log %29 : vector<8x1xf32>
    %31 = vector.broadcast %30 : vector<8x1xf32> to vector<8x16xf32>
    %32 = arith.subf %26, %31 : vector<8x16xf32>
    %c0_16 = arith.constant 0 : index
    %c0_17 = arith.constant 0 : index
    %33 = vector.load %arg7[%c0_16, %c0_17] : memref<8x16xf32, #tpu.memory_space<vmem>>, vector<8x16xf32>
    tpu.vector_store %arg7[%c0_16, %c0_17], %32 {strides = array<i32>} : memref<8x16xf32, #tpu.memory_space<vmem>>, vector<8x16xf32>,
    return
  }
  func.func @transform_0(%arg0: i32) -> (i32, i32) {
    %c0_i32 = arith.constant 0 : i32
    %c0_i32_0 = arith.constant 0 : i32
    return %arg0, %c0_i32 : i32, i32
  }
  func.func @transform_1(%arg0: i32) -> (i32, i32) {
    %c0_i32 = arith.constant 0 : i32
    %c0_i32_0 = arith.constant 0 : i32
    %c0_i32_1 = arith.constant 0 : i32
    return %c0_i32, %c0_i32_0 : i32, i32
  }
  func.func @transform_2(%arg0: i32) -> (i32, i32) {
    %c0_i32 = arith.constant 0 : i32
    %c0_i32_0 = arith.constant 0 : i32
    %c0_i32_1 = arith.constant 0 : i32
    return %c0_i32, %c0_i32_0 : i32, i32
  }
  func.func @transform_3(%arg0: i32) -> (i32, i32) {
    %c0_i32 = arith.constant 0 : i32
    %c0_i32_0 = arith.constant 0 : i32
    %c0_i32_1 = arith.constant 0 : i32
    return %c0_i32, %c0_i32_0 : i32, i32
  }
  func.func @transform_4(%arg0: i32) -> (i32, i32) {
    %c0_i32 = arith.constant 0 : i32
    %c0_i32_0 = arith.constant 0 : i32
    %c0_i32_1 = arith.constant 0 : i32
    return %c0_i32, %c0_i32_0 : i32, i32
  }
  func.func @transform_5(%arg0: i32) -> (i32, i32) {
    %c0_i32 = arith.constant 0 : i32
    %c0_i32_0 = arith.constant 0 : i32
    %c0_i32_1 = arith.constant 0 : i32
    return %c0_i32, %c0_i32_0 : i32, i32
  }
  func.func @transform_6(%arg0: i32) -> (i32, i32) {
    %c0_i32 = arith.constant 0 : i32
    %c0_i32_0 = arith.constant 0 : i32
    return %arg0, %c0_i32 : i32, i32
  }
}

</mosaic_0001>

<llo_original>
// kernel: policy_forward.1
$region0: #{policy_forward.1}
  #allocation0 [shape = 'u32[]', space=smem, size = 0x4, offset = 0x4, fixed_abs, tag = 'smem constant byte address 0x4 - core index']
  #allocation1 [shape = 'u32[72,128]{1,0:T(1,128)}', space=vmem, size = 0x9000, scoped, tag = 'internal scratch']
  %s0 = inlined_call_operand.vmem [shape: s32[16,1], index: 0, kind: input, shape index: {}]
  %s1 = inlined_call_operand.vmem [shape: bf16[16,128], index: 1, kind: input, shape index: {}]
  %s2 = inlined_call_operand.vmem [shape: bf16[128,128], index: 2, kind: input, shape index: {}]
  %s3 = inlined_call_operand.vmem [shape: f32[1,128], index: 3, kind: input, shape index: {}]
  %s4 = inlined_call_operand.vmem [shape: bf16[128,16], index: 4, kind: input, shape index: {}]
  %s5 = inlined_call_operand.vmem [shape: f32[1,16], index: 5, kind: input, shape index: {}]
  %s6 = inlined_call_operand.vmem [shape: f32[16,16], index: 6, kind: output, shape index: {}]
  %s7 = sld [smem:[#allocation0]]
  $region57: #{policy_forward.1} parent=0
    _
  %s9 = ssub.s32 1, %s7
  %s10 = scalar_select 0, %s9, %s7
  loop: start=0, step=1, limit=4
  $region2: #{policy_forward.1} parent=0 // loop_pre_header
    _
  $region3: #{policy_forward.1} parent=0 // loop_header
    %s12 = sphi 0, %s16
    %p13 = scmp.ge.s32.totalorder %s12, 4
    %s22 = sphi 0, %s24
    %s25 = sphi 0, %s22
    %s26 = sphi 0, %s25
    %s42 = sphi 0, %s26
    %s46 = sphi 0, %s46
    %s48 = sphi 0, %s46
    %s49 = sphi 0, %s48
    %s63 = sphi 0, %s49
    %s67 = sphi 0, %s67
    %s69 = sphi 0, %s67
    %s70 = sphi 0, %s69
    %s84 = sphi 0, %s70
    %s88 = sphi 0, %s88
    %s90 = sphi 0, %s88
    %s91 = sphi 0, %s90
    %s105 = sphi 0, %s91
    %s109 = sphi 0, %s109
    %s111 = sphi 0, %s109
    %s112 = sphi 0, %s111
    %s126 = sphi 0, %s112
    %s130 = sphi 0, %s130
    %s132 = sphi 0, %s130
    %s133 = sphi 0, %s132
    %s147 = sphi 0, %s133
    %s153 = sphi 0, %s155
    %s156 = sphi 0, %s153
    %s157 = sphi 0, %s156
    %s173 = sphi 0, %s157
  $region4: #{policy_forward.1} parent=0 // loop_header_branch
    %15 = sbr.rel (%p13) target = $region8
  $region5: #{policy_forward.1} parent=0 // loop_body
    %s17 = ssub.s32 %s12, 1
    %s18 = ssub.s32 %s12, 2
    %s19 = sadd.s32 %s12, 1
    %s20 = ssub.s32 %s12, %s19
    %p21 = scmp.eq.s32.totalorder %s20, 0
    %s23 = sadd.s32 %s22, 1
    %s24 = scalar_select %p21, %s22, %s23
    %p27 = pneg %p21
    %p28 = scmp.eq.s32.totalorder %s12, 1
    %p29 = por %p27, %p28
    %p30 = scmp.ne.s32.totalorder %s22, %s25
    %p31 = scmp.eq.s32.totalorder %s12, 0
    %p32 = por %p30, %p31
    %p33 = scmp.ne.s32.totalorder %s22, %s25
    %p34 = scmp.eq.s32.totalorder %s17, 1
    %p35 = por %p33, %p34
    %p36 = scmp.ne.s32.totalorder %s25, %s26
    %p37 = scmp.eq.s32.totalorder %s17, 0
    %p38 = por %p36, %p37
    %p39 = scmp.ne.s32.totalorder %s25, %s26
    %p40 = scmp.eq.s32.totalorder %s18, 1
    %p41 = por %p39, %p40
    %p43 = scmp.ne.s32.totalorder %s26, %s42
    %p44 = scmp.eq.s32.totalorder %s18, 0
    %p45 = por %p43, %p44
    %s47 = sadd.s32 %s46, 1
    %p50 = scmp.eq.s32.totalorder %s12, 1
    %p51 = scmp.ne.s32.totalorder %s46, %s48
    %p52 = scmp.eq.s32.totalorder %s12, 0
    %p53 = por %p51, %p52
    %p54 = scmp.ne.s32.totalorder %s46, %s48
    %p55 = scmp.eq.s32.totalorder %s17, 1
    %p56 = por %p54, %p55
    %p57 = scmp.ne.s32.totalorder %s48, %s49
    %p58 = scmp.eq.s32.totalorder %s17, 0
    %p59 = por %p57, %p58
    %p60 = scmp.ne.s32.totalorder %s48, %s49
    %p61 = scmp.eq.s32.totalorder %s18, 1
    %p62 = por %p60, %p61
    %p64 = scmp.ne.s32.totalorder %s49, %s63
    %p65 = scmp.eq.s32.totalorder %s18, 0
    %p66 = por %p64, %p65
    %s68 = sadd.s32 %s67, 1
    %p71 = scmp.eq.s32.totalorder %s12, 1
    %p72 = scmp.ne.s32.totalorder %s67, %s69
    %p73 = scmp.eq.s32.totalorder %s12, 0
    %p74 = por %p72, %p73
    %p75 = scmp.ne.s32.totalorder %s67, %s69
    %p76 = scmp.eq.s32.totalorder %s17, 1
    %p77 = por %p75, %p76
    %p78 = scmp.ne.s32.totalorder %s69, %s70
    %p79 = scmp.eq.s32.totalorder %s17, 0
    %p80 = por %p78, %p79
    %p81 = scmp.ne.s32.totalorder %s69, %s70
    %p82 = scmp.eq.s32.totalorder %s18, 1
    %p83 = por %p81, %p82
    %p85 = scmp.ne.s32.totalorder %s70, %s84
    %p86 = scmp.eq.s32.totalorder %s18, 0
    %p87 = por %p85, %p86
    %s89 = sadd.s32 %s88, 1
    %p92 = scmp.eq.s32.totalorder %s12, 1
    %p93 = scmp.ne.s32.totalorder %s88, %s90
    %p94 = scmp.eq.s32.totalorder %s12, 0
    %p95 = por %p93, %p94
    %p96 = scmp.ne.s32.totalorder %s88, %s90
    %p97 = scmp.eq.s32.totalorder %s17, 1
    %p98 = por %p96, %p97
    %p99 = scmp.ne.s32.totalorder %s90, %s91
    %p100 = scmp.eq.s32.totalorder %s17, 0
    %p101 = por %p99, %p100
    %p102 = scmp.ne.s32.totalorder %s90, %s91
    %p103 = scmp.eq.s32.totalorder %s18, 1
    %p104 = por %p102, %p103
    %p106 = scmp.ne.s32.totalorder %s91, %s105
    %p107 = scmp.eq.s32.totalorder %s18, 0
    %p108 = por %p106, %p107
    %s110 = sadd.s32 %s109, 1
    %p113 = scmp.eq.s32.totalorder %s12, 1
    %p114 = scmp.ne.s32.totalorder %s109, %s111
    %p115 = scmp.eq.s32.totalorder %s12, 0
    %p116 = por %p114, %p115
    %p117 = scmp.ne.s32.totalorder %s109, %s111
    %p118 = scmp.eq.s32.totalorder %s17, 1
    %p119 = por %p117, %p118
    %p120 = scmp.ne.s32.totalorder %s111, %s112
    %p121 = scmp.eq.s32.totalorder %s17, 0
    %p122 = por %p120, %p121
    %p123 = scmp.ne.s32.totalorder %s111, %s112
    %p124 = scmp.eq.s32.totalorder %s18, 1
    %p125 = por %p123, %p124
    %p127 = scmp.ne.s32.totalorder %s112, %s126
    %p128 = scmp.eq.s32.totalorder %s18, 0
    %p129 = por %p127, %p128
    %s131 = sadd.s32 %s130, 1
    %p134 = scmp.eq.s32.totalorder %s12, 1
    %p135 = scmp.ne.s32.totalorder %s130, %s132
    %p136 = scmp.eq.s32.totalorder %s12, 0
    %p137 = por %p135, %p136
    %p138 = scmp.ne.s32.totalorder %s130, %s132
    %p139 = scmp.eq.s32.totalorder %s17, 1
    %p140 = por %p138, %p139
    %p141 = scmp.ne.s32.totalorder %s132, %s133
    %p142 = scmp.eq.s32.totalorder %s17, 0
    %p143 = por %p141, %p142
    %p144 = scmp.ne.s32.totalorder %s132, %s133
    %p145 = scmp.eq.s32.totalorder %s18, 1
    %p146 = por %p144, %p145
    %p148 = scmp.ne.s32.totalorder %s133, %s147
    %p149 = scmp.eq.s32.totalorder %s18, 0
    %p150 = por %p148, %p149
    %s151 = ssub.s32 %s12, %s19
    %p152 = scmp.eq.s32.totalorder %s151, 0
    %s154 = sadd.s32 %s153, 1
    %s155 = scalar_select %p152, %s153, %s154
    %p158 = pneg %p152
    %p159 = scmp.eq.s32.totalorder %s12, 1
    %p160 = por %p158, %p159
    %p161 = scmp.ne.s32.totalorder %s153, %s156
    %p162 = scmp.eq.s32.totalorder %s12, 0
    %p163 = por %p161, %p162
    %p164 = scmp.ne.s32.totalorder %s153, %s156
    %p165 = scmp.eq.s32.totalorder %s17, 1
    %p166 = por %p164, %p165
    %p167 = scmp.ne.s32.totalorder %s156, %s157
    %p168 = scmp.eq.s32.totalorder %s17, 0
    %p169 = por %p167, %p168
    %p170 = scmp.ne.s32.totalorder %s156, %s157
    %p171 = scmp.eq.s32.totalorder %s18, 1
    %p172 = por %p170, %p171
    %p174 = scmp.ne.s32.totalorder %s157, %s173
    %p175 = scmp.eq.s32.totalorder %s18, 0
    %p176 = por %p174, %p175
    %p177 = scmp.le.s32.totalorder 1, %s12
    %p178 = scmp.lt.s32.totalorder %s12, 3
    %p179 = pnand %p177, %p178
    %p180 = pneg %p179
    // Predicated region
    $region9: #{policy_forward.1} parent=5 // pred_check
      _
    $region10: #{policy_forward.1} parent=5 // pred_check_branch
      %182 = sbr.rel (%p179) target = $region12
    $region11: #{policy_forward.1} parent=5 // pred_region
      %s183 = ssub.s32 %s12, 1
      // Predicated region
      $region13: #{policy_forward.1} parent=11 // pred_check
        %p184 = pneg %p59
      $region14: #{policy_forward.1} parent=11 // pred_check_branch
        %186 = sbr.rel (%p184) target = $region16
      $region15: #{policy_forward.1} parent=11 // pred_region
        _
      $region16: #{policy_forward.1} parent=11 // pred_fallthru
        _
      // Predicated region
      $region17: #{policy_forward.1} parent=11 // pred_check
        %p187 = pneg %p80
      $region18: #{policy_forward.1} parent=11 // pred_check_branch
        %189 = sbr.rel (%p187) target = $region20
      $region19: #{policy_forward.1} parent=11 // pred_region
        _
      $region20: #{policy_forward.1} parent=11 // pred_fallthru
        _
      // Predicated region
      $region21: #{policy_forward.1} parent=11 // pred_check
        %p190 = pneg %p101
      $region22: #{policy_forward.1} parent=11 // pred_check_branch
        %192 = sbr.rel (%p190) target = $region24
      $region23: #{policy_forward.1} parent=11 // pred_region
        _
      $region24: #{policy_forward.1} parent=11 // pred_fallthru
        _
      // Predicated region
      $region25: #{policy_forward.1} parent=11 // pred_check
        %p193 = pneg %p122
      $region26: #{policy_forward.1} parent=11 // pred_check_branch
        %195 = sbr.rel (%p193) target = $region28
      $region27: #{policy_forward.1} parent=11 // pred_region
        _
      $region28: #{policy_forward.1} parent=11 // pred_fallthru
        _
      // Predicated region
      $region29: #{policy_forward.1} parent=11 // pred_check
        %p196 = pneg %p143
      $region30: #{policy_forward.1} parent=11 // pred_check_branch
        %198 = sbr.rel (%p196) target = $region32
      $region31: #{policy_forward.1} parent=11 // pred_region
        _
      $region32: #{policy_forward.1} parent=11 // pred_fallthru
        _
    $region12: #{policy_forward.1} parent=5 // pred_fallthru
      _
    %p199 = scmp.lt.s32.totalorder %s12, 2
    // Predicated region
    $region33: #{policy_forward.1} parent=5 // pred_check
      %p200 = pneg %p199
    $region34: #{policy_forward.1} parent=5 // pred_check_branch
      %202 = sbr.rel (%p200) target = $region36
    $region35: #{policy_forward.1} parent=5 // pred_region
      // Predicated region
      $region37: #{policy_forward.1} parent=35 // pred_check
        %p203 = pneg %p32
      $region38: #{policy_forward.1} parent=35 // pred_check_branch
        %205 = sbr.rel (%p203) target = $region40
      $region39: #{policy_forward.1} parent=35 // pred_region
        %p206 = scmp.lt.s32.totalorder %s12, 1
        %s207 = scalar_select %p206, %s12, 1
        %s208 = smul.addr %s207, 8
        %s209 = scalar_lea.vmem %s0, %s208
      $region40: #{policy_forward.1} parent=35 // pred_fallthru
        _
    $region36: #{policy_forward.1} parent=5 // pred_fallthru
      _
    %p210 = scmp.le.s32.totalorder 1, %s12
    %p211 = scmp.lt.s32.totalorder %s12, 3
    %p212 = pnand %p210, %p211
    %p213 = pneg %p212
    // Predicated region
    $region41: #{policy_forward.1} parent=5 // pred_check
      _
    $region42: #{policy_forward.1} parent=5 // pred_check_branch
      %215 = sbr.rel (%p212) target = $region44
    $region43: #{policy_forward.1} parent=5 // pred_region
      %s216 = ssub.s32 %s12, 1
      %p217 = scmp.lt.s32.totalorder %s17, 1
      %s218 = scalar_select %p217, %s17, 1
      %s219 = smul.addr %s218, 8
      %s220 = scalar_lea.vmem %s0, %s219
      %p221 = pneg %p38
      %p222 = pneg %p35
      %p223 = pneg %p59
      %p224 = pneg %p56
      %p225 = pneg %p80
      %p226 = pneg %p77
      %p227 = pneg %p101
      %p228 = pneg %p98
      %p229 = pneg %p122
      %p230 = pneg %p119
      %p231 = pneg %p143
      %p232 = pneg %p140
      %p233 = pneg %p169
      %p234 = pneg %p166
      %p235 = scmp.lt.s32.totalorder %s17, 1
      %s236 = scalar_select %p235, %s17, 1
      %s237 = smul.addr %s236, 8
      %s238 = scalar_lea.vmem %s6, %s237
      %p239 = scmp.lt.s32.totalorder %s17, 1
      %s240 = scalar_select %p239, %s17, 1
      %s241 = smul.addr %s240, 8
      %s242 = scalar_lea.vmem %s0, %s241
      %p243 = scmp.lt.s32.totalorder %s17, 1
      %s244 = scalar_select %p243, %s17, 1
      %s245 = smul.addr %s244, 8
      %s246 = scalar_lea.vmem %s6, %s245
      %v248 = vld [vmem:[%s242] sm:$0xff]
      %v249 = vlaneseq
      %v250 = vand.u32 %v249, 127
      %251 = vset.pattern.permute.xlu0 0
      %252 = vperm.xlu0 %251, %v248
      %v253 = vpop.permute.xlu0 %252
      %vm254 = vcmp.eq.s32.totalorder %v253, %v250
      %v255 = vsel %vm254, 1, 0
      %v256 = vcvt.s32.f32 %v255
      %v257 = vpack.c.bf16 %v256, %v256
      %v258 = vld [vmem:[%s1] sm:$0xf]
      %v259 = vld [vmem:[%s1 + $0x4] sm:$0xf]
      %v262 = vunpack.c.l.b16 %v258
      %v263 = vunpack.c.l.b16 %v259
      %v264 = vpack.c.b16 %v263, %v262
      %vm266 = vcmask 130048
      %v268 = vsel %vm266, %v257, 0
      %270 = vmatpush.bf16.msra.mxu0 0
      %271 = vmatpush.bf16.msra.mxu0 0
      %272 = vmatpush.bf16.msra.mxu0 0
      %273 = vmatpush.bf16.msra.mxu0 0
      %274 = vmatpush.bf16.msra.mxu0 0
      %275 = vmatpush.bf16.msra.mxu0 0
      %276 = vmatpush.bf16.msra.mxu0 0
      %277 = vmatpush.bf16.msra.mxu0 %v264
      %278 = vmatmul.bf16.gmra.mxu0 %v268
      %v279 = vpop.f32.mrf.mxu0
      %v280 = vadd.f32 0.0, %v279
      %v281 = vpop.f32.mrf.mxu0
      %282 = vdwg.mxu0
      %v283 = vpack.c.bf16 %v280, %v280
      %v284 = vld [vmem:[%s2] sm:$0xf]
      %v285 = vld [vmem:[%s2 + $0x4] sm:$0xf]
      %v286 = vld [vmem:[%s2 + $0x8] sm:$0xf]
      %v287 = vld [vmem:[%s2 + $0xc] sm:$0xf]
      %v288 = vld [vmem:[%s2 + $0x10] sm:$0xf]
      %v289 = vld [vmem:[%s2 + $0x14] sm:$0xf]
      %v290 = vld [vmem:[%s2 + $0x18] sm:$0xf]
      %v291 = vld [vmem:[%s2 + $0x1c] sm:$0xf]
      %v292 = vld [vmem:[%s2 + $0x20] sm:$0xf]
      %v293 = vld [vmem:[%s2 + $0x24] sm:$0xf]
      %v294 = vld [vmem:[%s2 + $0x28] sm:$0xf]
      %v295 = vld [vmem:[%s2 + $0x2c] sm:$0xf]
      %v296 = vld [vmem:[%s2 + $0x30] sm:$0xf]
      %v297 = vld [vmem:[%s2 + $0x34] sm:$0xf]
      %v298 = vld [vmem:[%s2 + $0x38] sm:$0xf]
      %v299 = vld [vmem:[%s2 + $0x3c] sm:$0xf]
      %v300 = vld [vmem:[%s3] sm:$0x1]
      %v302 = vperm.slane %v300, 0
      %v320 = vunpack.c.l.b16 %v284
      %v321 = vunpack.c.l.b16 %v285
      %v322 = vunpack.c.l.b16 %v286
      %v323 = vunpack.c.l.b16 %v287
      %v324 = vunpack.c.l.b16 %v288
      %v325 = vunpack.c.l.b16 %v289
      %v326 = vunpack.c.l.b16 %v290
      %v327 = vunpack.c.l.b16 %v291
      %v328 = vunpack.c.l.b16 %v292
      %v329 = vunpack.c.l.b16 %v293
      %v330 = vunpack.c.l.b16 %v294
      %v331 = vunpack.c.l.b16 %v295
      %v332 = vunpack.c.l.b16 %v296
      %v333 = vunpack.c.l.b16 %v297
      %v334 = vunpack.c.l.b16 %v298
      %v335 = vunpack.c.l.b16 %v299
      %v336 = vpack.c.b16 %v321, %v320
      %v337 = vpack.c.b16 %v323, %v322
      %v338 = vpack.c.b16 %v325, %v324
      %v339 = vpack.c.b16 %v327, %v326
      %v340 = vpack.c.b16 %v329, %v328
      %v341 = vpack.c.b16 %v331, %v330
      %v342 = vpack.c.b16 %v333, %v332
      %v343 = vpack.c.b16 %v335, %v334
      %352 = vmatpush.bf16.msra.mxu0 %v343
      %353 = vmatpush.bf16.msra.mxu0 %v342
      %354 = vmatpush.bf16.msra.mxu0 %v341
      %355 = vmatpush.bf16.msra.mxu0 %v340
      %356 = vmatpush.bf16.msra.mxu0 %v339
      %357 = vmatpush.bf16.msra.mxu0 %v338
      %358 = vmatpush.bf16.msra.mxu0 %v337
      %359 = vmatpush.bf16.msra.mxu0 %v336
      %360 = vmatmul.bf16.gmra.mxu0 %v283
      %v361 = vpop.f32.mrf.mxu0
      %v362 = vadd.f32 %v302, %v361
      %v363 = vpop.f32.mrf.mxu0
      %364 = vdwg.mxu0
      %v365 = vmax.f32 %v362, 0.0
      %v366 = vpack.c.bf16 %v365, %v365
      %v367 = vld [vmem:[%s4] sm:$0xf]
      %v368 = vld [vmem:[%s4 + $0x4] sm:$0xf]
      %v369 = vld [vmem:[%s4 + $0x8] sm:$0xf]
      %v370 = vld [vmem:[%s4 + $0xc] sm:$0xf]
      %v371 = vld [vmem:[%s4 + $0x10] sm:$0xf]
      %v372 = vld [vmem:[%s4 + $0x14] sm:$0xf]
      %v373 = vld [vmem:[%s4 + $0x18] sm:$0xf]
      %v374 = vld [vmem:[%s4 + $0x1c] sm:$0xf]
      %v375 = vld [vmem:[%s4 + $0x20] sm:$0xf]
      %v376 = vld [vmem:[%s4 + $0x24] sm:$0xf]
      %v377 = vld [vmem:[%s4 + $0x28] sm:$0xf]
      %v378 = vld [vmem:[%s4 + $0x2c] sm:$0xf]
      %v379 = vld [vmem:[%s4 + $0x30] sm:$0xf]
      %v380 = vld [vmem:[%s4 + $0x34] sm:$0xf]
      %v381 = vld [vmem:[%s4 + $0x38] sm:$0xf]
      %v382 = vld [vmem:[%s4 + $0x3c] sm:$0xf]
      %v383 = vld [vmem:[%s5] sm:$0x1]
      %v385 = vperm.slane %v383, 0
      %v403 = vunpack.c.l.b16 %v367
      %v404 = vunpack.c.l.b16 %v368
      %v405 = vunpack.c.l.b16 %v369
      %v406 = vunpack.c.l.b16 %v370
      %v407 = vunpack.c.l.b16 %v371
      %v408 = vunpack.c.l.b16 %v372
      %v409 = vunpack.c.l.b16 %v373
      %v410 = vunpack.c.l.b16 %v374
      %v411 = vunpack.c.l.b16 %v375
      %v412 = vunpack.c.l.b16 %v376
      %v413 = vunpack.c.l.b16 %v377
      %v414 = vunpack.c.l.b16 %v378
      %v415 = vunpack.c.l.b16 %v379
      %v416 = vunpack.c.l.b16 %v380
      %v417 = vunpack.c.l.b16 %v381
      %v418 = vunpack.c.l.b16 %v382
      %v419 = vpack.c.b16 %v404, %v403
      %v420 = vpack.c.b16 %v406, %v405
      %v421 = vpack.c.b16 %v408, %v407
      %v422 = vpack.c.b16 %v410, %v409
      %v423 = vpack.c.b16 %v412, %v411
      %v424 = vpack.c.b16 %v414, %v413
      %v425 = vpack.c.b16 %v416, %v415
      %v426 = vpack.c.b16 %v418, %v417
      %435 = vmatpush.bf16.msra.mxu0 %v426
      %436 = vmatpush.bf16.msra.mxu0 %v425
      %437 = vmatpush.bf16.msra.mxu0 %v424
      %438 = vmatpush.bf16.msra.mxu0 %v423
      %439 = vmatpush.bf16.msra.mxu0 %v422
      %440 = vmatpush.bf16.msra.mxu0 %v421
      %441 = vmatpush.bf16.msra.mxu0 %v420
      %442 = vmatpush.bf16.msra.mxu0 %v419
      %443 = vmatmul.bf16.gmra.mxu0 %v366
      %v444 = vpop.f32.mrf.mxu0
      %v445 = vadd.f32 %v385, %v444
      %v446 = vpop.f32.mrf.mxu0
      %447 = vdwg.mxu0
      %v448 = vsel %vm266, %v445, -inf
      %449 = vmax.xlane.f32.xlu0 %v448
      %v450 = vpop.xlane.xlu0 %449
      %v451 = vsub.f32 %v445, %v450
      %v452 = vmul.f32 %v451, 1.442695
      %v453 = vpow.pop %v452
      %v454 = vsel %vm266, %v453, 0.0
      %455 = vadd.xlane.f32.xlu0 %v454
      %v456 = vpop.xlane.xlu0 %455
      %v457 = vlog2.pop %v456
      %v458 = vmul.f32 %v457, 0.6931472
      %v459 = vsub.f32 %v451, %v458
      %460 = vst.msk [vmem:[%s246] sm:$0xff] %vm266, %v459
      %p461 = scmp.lt.s32.totalorder %s17, 1
      %s462 = scalar_select %p461, %s17, 1
      %s463 = smul.addr %s462, 8
      %s464 = scalar_lea.vmem %s6, %s463
      // Predicated region
      $region45: #{policy_forward.1} parent=43 // pred_check
        %p465 = pneg %p166
      $region46: #{policy_forward.1} parent=43 // pred_check_branch
        %467 = sbr.rel (%p465) target = $region48
      $region47: #{policy_forward.1} parent=43 // pred_region
        _
      $region48: #{policy_forward.1} parent=43 // pred_fallthru
        _
    $region44: #{policy_forward.1} parent=5 // pred_fallthru
      _
    %p468 = scmp.le.s32.totalorder 2, %s12
    // Predicated region
    $region49: #{policy_forward.1} parent=5 // pred_check
      %p469 = pneg %p468
    $region50: #{policy_forward.1} parent=5 // pred_check_branch
      %471 = sbr.rel (%p469) target = $region52
    $region51: #{policy_forward.1} parent=5 // pred_region
      %s472 = ssub.s32 %s12, 2
      // Predicated region
      $region53: #{policy_forward.1} parent=51 // pred_check
        %p473 = pneg %p172
      $region54: #{policy_forward.1} parent=51 // pred_check_branch
        %475 = sbr.rel (%p473) target = $region56
      $region55: #{policy_forward.1} parent=51 // pred_region
        %p476 = scmp.lt.s32.totalorder %s18, 1
        %s477 = scalar_select %p476, %s18, 1
        %s478 = smul.addr %s477, 8
        %s479 = scalar_lea.vmem %s6, %s478
      $region56: #{policy_forward.1} parent=51 // pred_fallthru
        _
    $region52: #{policy_forward.1} parent=5 // pred_fallthru
      _
  $region6: #{policy_forward.1} parent=0 // loop_footer
    %s16 = sadd.s32 1, %s12
  $region7: #{policy_forward.1} parent=0 // loop_footer_branch
    %11 = sbr.rel target = $region3
  $region8: #{policy_forward.1} parent=0 // loop_exit
    _

</llo_original>
